<compile_context>
chip_gen: v7x
topology: tpu7x:2x2x1
jax: 0.10.0
libtpu: 0.0.40
codegen_flags: <defaults>
</compile_context>

<pallas_src>
import functools

import jax
import jax.numpy as jnp
from jax.experimental import pallas as pl
from jax.experimental.pallas import tpu as pltpu


def _round_up(x: int, m: int) -> int:
    return ((x + m - 1) // m) * m


def _cdiv(a: int, b: int) -> int:
    return (a + b - 1) // b


def _pad_2d(a, rows: int, cols: int):
    r, c = a.shape
    if r == rows and c == cols:
        return a
    return jnp.pad(a, ((0, rows - r), (0, cols - c)))


# Does this jax version accept pipeline_mode=pl.Buffered(k) on BlockSpec?
try:
    pl.BlockSpec((8, 128), lambda i: (0, 0), pipeline_mode=pl.Buffered(1))
    _SUPPORTS_PIPELINE_MODE = True
except Exception:  # pragma: no cover - older jax
    _SUPPORTS_PIPELINE_MODE = False


def _spec(shape, index_map, buffers=None):
    """BlockSpec with optional explicit buffer count (falls back gracefully)."""
    if buffers is not None and _SUPPORTS_PIPELINE_MODE:
        return pl.BlockSpec(shape, index_map, pipeline_mode=pl.Buffered(buffers))
    return pl.BlockSpec(shape, index_map)


def _physical_vmem_bytes() -> int:
    try:
        return int(pltpu.get_tpu_info().vmem_capacity_bytes)
    except Exception:
        return 64 * 1024 * 1024  # conservative: v7x per-TensorCore VMEM


def ffnn_kernel(x_ref, w1_ref, b1_ref, w2_ref, b2_ref, o_ref):
    # hidden = tanh(x @ W1 + b1)   -- MXU matmul (bf16 or f32 in, f32 acc),
    # bias-add + tanh in f32 (EUP), then cast back for the second MXU matmul.
    h = jnp.dot(x_ref[...], w1_ref[...], preferred_element_type=jnp.float32)
    h = jnp.tanh(h + b1_ref[...])                      # b1 is (1, H): broadcasts
    y = jnp.dot(h.astype(w2_ref.dtype), w2_ref[...],
                preferred_element_type=jnp.float32)
    o_ref[...] = (y + b2_ref[...]).astype(o_ref.dtype)


@functools.partial(jax.jit,
                   static_argnames=("max_tile_b", "use_bf16", "force_pallas"))
def ffnn_forward(x, w1, b1, w2, b2, *, max_tile_b: int = 512,
                 use_bf16: bool = True, force_pallas: bool = False):
    """x: [B, input_dim]; w1: [input_dim, hidden]; b1: [1, hidden];
    w2: [hidden, output]; b2: [1, output]  ->  [B, output]

    Weights are stored pre-transposed ([in_features, out_features]) so the
    kernel computes y = tanh(x @ W1 + b1) @ W2 + b2 directly on the MXU.
    """
    B, input_dim = x.shape
    hidden_dim = w1.shape[1]
    output_dim = w2.shape[1]

    # --- tiny-problem bailout: padding to the 128-lane grain would dominate ---
    if (not force_pallas and input_dim < 64 and hidden_dim < 64
            and output_dim < 64 and B < 256):
        return (jnp.tanh(x @ w1 + b1) @ w2 + b2).astype(x.dtype)

    compute_dtype = jnp.bfloat16 if use_bf16 else x.dtype
    cdt = jnp.dtype(compute_dtype).itemsize
    odt = jnp.dtype(x.dtype).itemsize
    f32b = 4

    # ---- pad feature dims to the 128-lane grain -----------------------------
    in_p = _round_up(input_dim, 128)
    hid_p = _round_up(hidden_dim, 128)
    out_p = _round_up(output_dim, 128)

    # ---- VMEM accounting (each buffer at its own dtype) ----------------------
    vmem_phys = _physical_vmem_bytes()
    vmem_budget = int(vmem_phys * 0.80)          # headroom for compiler scratch
    wbuf = 1 if _SUPPORTS_PIPELINE_MODE else 2   # weights single-buffered if possible
    resident_w = ((in_p * hid_p + hid_p * out_p) * cdt
                  + (hid_p + out_p) * f32b) * wbuf

    def tile_bytes(tb, xbuf):
        return (xbuf * tb * in_p * cdt            # x tiles
                + 2 * tb * out_p * odt            # out tiles (double-buffered)
                + tb * hid_p * (f32b + cdt))      # h (f32) + h cast for 2nd matmul

    if resident_w + tile_bytes(8, 2) > vmem_budget:
        # Weights cannot be made VMEM-resident (hits v7x's 64 MiB first).
        # TODO(synk): K-tiled Pallas path with an f32 VMEM accumulator instead
        # of falling back to XLA for very large hidden/input dims.
        return (jnp.tanh(x @ w1 + b1) @ w2 + b2).astype(x.dtype)

    # ---- balanced batch tiling; >=2 tiles so v7x can use both TensorCores ----
    n_tiles = _cdiv(B, max_tile_b)
    if n_tiles == 1 and B > 8:
        n_tiles = 2
    tile_b = _round_up(_cdiv(B, n_tiles), 8)
    while tile_b > 8 and resident_w + tile_bytes(tile_b, 2) > vmem_budget:
        tile_b = _round_up(max(8, tile_b // 2), 8)
    n_tiles = _cdiv(B, tile_b)
    b_p = n_tiles * tile_b
    grid = (n_tiles,)

    # Deeper x pipeline when HBM-stream bound (small hidden dim), VMEM permitting.
    x_buffers = 2
    if (_SUPPORTS_PIPELINE_MODE and hid_p <= 256 and n_tiles >= 3
            and resident_w + tile_bytes(tile_b, 3) <= vmem_budget):
        x_buffers = 3

    needed = resident_w + tile_bytes(tile_b, x_buffers)
    vmem_limit = max(int(needed * 1.25), 16 * 1024 * 1024)
    vmem_limit = min(vmem_limit, int(vmem_phys * 0.85))

    # ---- pad / cast operands -------------------------------------------------
    x_p = _pad_2d(x, b_p, in_p).astype(compute_dtype)
    w1_p = _pad_2d(w1, in_p, hid_p).astype(compute_dtype)
    w2_p = _pad_2d(w2, hid_p, out_p).astype(compute_dtype)
    b1_p = _pad_2d(b1, 1, hid_p).astype(jnp.float32)
    b2_p = _pad_2d(b2, 1, out_p).astype(jnp.float32)

    cost = pl.CostEstimate(
        flops=2 * b_p * (in_p * hid_p + hid_p * out_p),
        transcendentals=b_p * hid_p,
        bytes_accessed=int(b_p * in_p * cdt
                           + (in_p * hid_p + hid_p * out_p) * cdt
                           + (hid_p + out_p) * f32b
                           + b_p * out_p * odt),
    )

    out_padded = pl.pallas_call(
        ffnn_kernel,
        out_shape=jax.ShapeDtypeStruct((b_p, out_p), x.dtype),
        grid_spec=pltpu.PrefetchScalarGridSpec(
            num_scalar_prefetch=0,
            grid=grid,
            in_specs=[
                # batch-tiled activations (2- or 3-deep pipeline)
                _spec((tile_b, in_p), lambda i: (i, 0), buffers=x_buffers),
                # grid-invariant weights / biases -> VMEM-resident, single-buffered
                _spec((in_p, hid_p), lambda i: (0, 0), buffers=1),
                _spec((1, hid_p), lambda i: (0, 0), buffers=1),
                _spec((hid_p, out_p), lambda i: (0, 0), buffers=1),
                _spec((1, out_p), lambda i: (0, 0), buffers=1),
            ],
            out_specs=pl.BlockSpec((tile_b, out_p), lambda i: (i, 0)),
        ),
        compiler_params=pltpu.CompilerParams(
            dimension_semantics=("parallel",),
            vmem_limit_bytes=int(vmem_limit),
        ),
        cost_estimate=cost,
    )(x_p, w1_p, b1_p, w2_p, b2_p)

    # Slice away batch / output padding outside the kernel.
    return out_padded[:B, :output_dim]


def init_ffnn_params(key, input_dim, hidden_dim, output_dim, dtype=jnp.float32):
    """Deterministic init matching nn.Linear defaults: U(-1/sqrt(fan_in), ...)."""
    k1, k2, k3, k4 = jax.random.split(key, 4)
    bound1 = 1.0 / jnp.sqrt(input_dim)
    bound2 = 1.0 / jnp.sqrt(hidden_dim)
    # Stored already transposed: [in_features, out_features]
    w1 = jax.random.uniform(k1, (input_dim, hidden_dim), dtype, -bound1, bound1)
    b1 = jax.random.uniform(k2, (1, hidden_dim), dtype, -bound1, bound1)
    w2 = jax.random.uniform(k3, (hidden_dim, output_dim), dtype, -bound2, bound2)
    b2 = jax.random.uniform(k4, (1, output_dim), dtype, -bound2, bound2)
    return w1, b1, w2, b2


if __name__ == "__main__":
    batch = 64
    input_dim = 16
    hidden_dim = 32
    output_dim = 8

    key = jax.random.PRNGKey(0)
    kx, kp = jax.random.split(key)
    x = jax.random.normal(kx, (batch, input_dim), dtype=jnp.float32)
    w1, b1, w2, b2 = init_ffnn_params(kp, input_dim, hidden_dim, output_dim)

    # Pure-JAX reference (same math as the PyTorch module).
    ref = jnp.tanh(x @ w1 + b1) @ w2 + b2

    # Default bf16-MXU Pallas path (force_pallas so the kernel actually runs at
    # these small demo shapes).
    out = jax.block_until_ready(
        ffnn_forward(x, w1, b1, w2, b2, force_pallas=True))
    assert out.shape == (batch, output_dim)
    assert jnp.allclose(out, ref, atol=3e-2, rtol=3e-2), "bf16 path mismatch"

    # Bit-accurate f32 path.
    out_f32 = jax.block_until_ready(
        ffnn_forward(x, w1, b1, w2, b2, use_bf16=False, force_pallas=True))
    assert jnp.allclose(out_f32, ref, atol=1e-5, rtol=1e-5), "f32 path mismatch"

    print("KERNEL_OK")
</pallas_src>

<mosaic_0001>
module attributes {stable_mosaic.version = 11 : i64} {
  func.func @ffnn_kernel(%arg0: i32, %arg1: memref<32x128xbf16, #tpu.memory_space<vmem>>, %arg2: memref<128x128xbf16, #tpu.memory_space<vmem>>, %arg3: memref<1x128xf32, #tpu.memory_space<vmem>>, %arg4: memref<128x128xbf16, #tpu.memory_space<vmem>>, %arg5: memref<1x128xf32, #tpu.memory_space<vmem>>, %arg6: memref<32x128xf32, #tpu.memory_space<vmem>>) attributes {dimension_semantics = [#tpu.dimension_semantics<parallel>], iteration_bounds = array<i64: 2>, scalar_prefetch = 0 : i64, scratch_operands = 0 : i64, tpu.core_type = #tpu.core_type<tc>, window_params = [{pipeline_mode = #tpu.pipeline_mode<double_buffered>, transform_indices = @transform_0, window_bounds = array<i64: 32, 128>}, {pipeline_mode = #tpu.pipeline_mode<synchronous>, transform_indices = @transform_1, window_bounds = array<i64: 128, 128>}, {pipeline_mode = #tpu.pipeline_mode<synchronous>, transform_indices = @transform_2, window_bounds = array<i64: 1, 128>}, {pipeline_mode = #tpu.pipeline_mode<synchronous>, transform_indices = @transform_3, window_bounds = array<i64: 128, 128>}, {pipeline_mode = #tpu.pipeline_mode<synchronous>, transform_indices = @transform_4, window_bounds = array<i64: 1, 128>}, {transform_indices = @transform_5, window_bounds = array<i64: 32, 128>}]} {
    %c0 = arith.constant 0 : index
    %c0_0 = arith.constant 0 : index
    %0 = vector.load %arg1[%c0, %c0_0] : memref<32x128xbf16, #tpu.memory_space<vmem>>, vector<32x128xbf16>
    %c0_1 = arith.constant 0 : index
    %c0_2 = arith.constant 0 : index
    %1 = vector.load %arg2[%c0_1, %c0_2] : memref<128x128xbf16, #tpu.memory_space<vmem>>, vector<128x128xbf16>
    %cst = arith.constant dense<0.000000e+00> : vector<32x128xf32>
    %2 = tpu.matmul %0, %1, %cst {dimension_numbers = #tpu.dot_dimension_numbers<[1], [0], [0], [1], [0, 0, 1, 1], [], []>} : vector<32x128xbf16>, vector<128x128xbf16>, vector<32x128xf32> -> vector<32x128xf32>
    %c0_3 = arith.constant 0 : index
    %c0_4 = arith.constant 0 : index
    %3 = vector.load %arg3[%c0_3, %c0_4] : memref<1x128xf32, #tpu.memory_space<vmem>>, vector<1x128xf32>
    %4 = vector.broadcast %3 : vector<1x128xf32> to vector<32x128xf32>
    %5 = arith.addf %2, %4 : vector<32x128xf32>
    %6 = math.tanh %5 : vector<32x128xf32>
    %7 = arith.truncf %6 : vector<32x128xf32> to vector<32x128xbf16>
    %c0_5 = arith.constant 0 : index
    %c0_6 = arith.constant 0 : index
    %8 = vector.load %arg4[%c0_5, %c0_6] : memref<128x128xbf16, #tpu.memory_space<vmem>>, vector<128x128xbf16>
    %cst_7 = arith.constant dense<0.000000e+00> : vector<32x128xf32>
    %9 = tpu.matmul %7, %8, %cst_7 {dimension_numbers = #tpu.dot_dimension_numbers<[1], [0], [0], [1], [0, 0, 1, 1], [], []>} : vector<32x128xbf16>, vector<128x128xbf16>, vector<32x128xf32> -> vector<32x128xf32>
    %c0_8 = arith.constant 0 : index
    %c0_9 = arith.constant 0 : index
    %10 = vector.load %arg5[%c0_8, %c0_9] : memref<1x128xf32, #tpu.memory_space<vmem>>, vector<1x128xf32>
    %11 = vector.broadcast %10 : vector<1x128xf32> to vector<32x128xf32>
    %12 = arith.addf %9, %11 : vector<32x128xf32>
    %c0_10 = arith.constant 0 : index
    %c0_11 = arith.constant 0 : index
    %13 = vector.load %arg6[%c0_10, %c0_11] : memref<32x128xf32, #tpu.memory_space<vmem>>, vector<32x128xf32>
    tpu.vector_store %arg6[%c0_10, %c0_11], %12 {strides = array<i32>} : memref<32x128xf32, #tpu.memory_space<vmem>>, vector<32x128xf32>,
    return
  }
  func.func @transform_0(%arg0: i32) -> (i32, i32) {
    %c0_i32 = arith.constant 0 : i32
    %c0_i32_0 = arith.constant 0 : i32
    return %arg0, %c0_i32 : i32, i32
  }
  func.func @transform_1(%arg0: i32) -> (i32, i32) {
    %c0_i32 = arith.constant 0 : i32
    %c0_i32_0 = arith.constant 0 : i32
    %c0_i32_1 = arith.constant 0 : i32
    return %c0_i32, %c0_i32_0 : i32, i32
  }
  func.func @transform_2(%arg0: i32) -> (i32, i32) {
    %c0_i32 = arith.constant 0 : i32
    %c0_i32_0 = arith.constant 0 : i32
    %c0_i32_1 = arith.constant 0 : i32
    return %c0_i32, %c0_i32_0 : i32, i32
  }
  func.func @transform_3(%arg0: i32) -> (i32, i32) {
    %c0_i32 = arith.constant 0 : i32
    %c0_i32_0 = arith.constant 0 : i32
    %c0_i32_1 = arith.constant 0 : i32
    return %c0_i32, %c0_i32_0 : i32, i32
  }
  func.func @transform_4(%arg0: i32) -> (i32, i32) {
    %c0_i32 = arith.constant 0 : i32
    %c0_i32_0 = arith.constant 0 : i32
    %c0_i32_1 = arith.constant 0 : i32
    return %c0_i32, %c0_i32_0 : i32, i32
  }
  func.func @transform_5(%arg0: i32) -> (i32, i32) {
    %c0_i32 = arith.constant 0 : i32
    %c0_i32_0 = arith.constant 0 : i32
    return %arg0, %c0_i32 : i32, i32
  }
}

</mosaic_0001>

<llo_original>
// kernel: ffnn_forward.1
$region0: #{ffnn_forward.1}
  #allocation0 [shape = 'u32[]', space=smem, size = 0x4, offset = 0x4, fixed_abs, tag = 'smem constant byte address 0x4 - core index']
  #allocation1 [shape = 'u32[144,128]{1,0:T(1,128)}', space=vmem, size = 0x12000, scoped, tag = 'internal scratch']
  %s0 = inlined_call_operand.vmem [shape: bf16[64,128], index: 0, kind: input, shape index: {}]
  %s1 = inlined_call_operand.vmem [shape: bf16[128,128], index: 1, kind: input, shape index: {}]
  %s2 = inlined_call_operand.vmem [shape: f32[1,128], index: 2, kind: input, shape index: {}]
  %s3 = inlined_call_operand.vmem [shape: bf16[128,128], index: 3, kind: input, shape index: {}]
  %s4 = inlined_call_operand.vmem [shape: f32[1,128], index: 4, kind: input, shape index: {}]
  %s5 = inlined_call_operand.vmem [shape: f32[64,128], index: 5, kind: output, shape index: {}]
  %s6 = sld [smem:[#allocation0]]
  $region53: #{ffnn_forward.1} parent=0
    _
  %s8 = ssub.s32 1, %s6
  %s9 = scalar_select 0, %s8, %s6
  loop: start=0, step=1, limit=4
  $region2: #{ffnn_forward.1} parent=0 // loop_pre_header
    _
  $region3: #{ffnn_forward.1} parent=0 // loop_header
    %s11 = sphi 0, %s15
    %p12 = scmp.ge.s32.totalorder %s11, 4
    %s21 = sphi 0, %s23
    %s24 = sphi 0, %s21
    %s25 = sphi 0, %s24
    %s41 = sphi 0, %s25
    %s45 = sphi 0, %s45
    %s47 = sphi 0, %s45
    %s48 = sphi 0, %s47
    %s62 = sphi 0, %s48
    %s66 = sphi 0, %s66
    %s68 = sphi 0, %s66
    %s69 = sphi 0, %s68
    %s83 = sphi 0, %s69
    %s87 = sphi 0, %s87
    %s89 = sphi 0, %s87
    %s90 = sphi 0, %s89
    %s104 = sphi 0, %s90
    %s108 = sphi 0, %s108
    %s110 = sphi 0, %s108
    %s111 = sphi 0, %s110
    %s125 = sphi 0, %s111
    %s131 = sphi 0, %s133
    %s134 = sphi 0, %s131
    %s135 = sphi 0, %s134
    %s151 = sphi 0, %s135
  $region4: #{ffnn_forward.1} parent=0 // loop_header_branch
    %14 = sbr.rel (%p12) target = $region8
  $region5: #{ffnn_forward.1} parent=0 // loop_body
    %s16 = ssub.s32 %s11, 1
    %s17 = ssub.s32 %s11, 2
    %s18 = sadd.s32 %s11, 1
    %s19 = ssub.s32 %s11, %s18
    %p20 = scmp.eq.s32.totalorder %s19, 0
    %s22 = sadd.s32 %s21, 1
    %s23 = scalar_select %p20, %s21, %s22
    %p26 = pneg %p20
    %p27 = scmp.eq.s32.totalorder %s11, 1
    %p28 = por %p26, %p27
    %p29 = scmp.ne.s32.totalorder %s21, %s24
    %p30 = scmp.eq.s32.totalorder %s11, 0
    %p31 = por %p29, %p30
    %p32 = scmp.ne.s32.totalorder %s21, %s24
    %p33 = scmp.eq.s32.totalorder %s16, 1
    %p34 = por %p32, %p33
    %p35 = scmp.ne.s32.totalorder %s24, %s25
    %p36 = scmp.eq.s32.totalorder %s16, 0
    %p37 = por %p35, %p36
    %p38 = scmp.ne.s32.totalorder %s24, %s25
    %p39 = scmp.eq.s32.totalorder %s17, 1
    %p40 = por %p38, %p39
    %p42 = scmp.ne.s32.totalorder %s25, %s41
    %p43 = scmp.eq.s32.totalorder %s17, 0
    %p44 = por %p42, %p43
    %s46 = sadd.s32 %s45, 1
    %p49 = scmp.eq.s32.totalorder %s11, 1
    %p50 = scmp.ne.s32.totalorder %s45, %s47
    %p51 = scmp.eq.s32.totalorder %s11, 0
    %p52 = por %p50, %p51
    %p53 = scmp.ne.s32.totalorder %s45, %s47
    %p54 = scmp.eq.s32.totalorder %s16, 1
    %p55 = por %p53, %p54
    %p56 = scmp.ne.s32.totalorder %s47, %s48
    %p57 = scmp.eq.s32.totalorder %s16, 0
    %p58 = por %p56, %p57
    %p59 = scmp.ne.s32.totalorder %s47, %s48
    %p60 = scmp.eq.s32.totalorder %s17, 1
    %p61 = por %p59, %p60
    %p63 = scmp.ne.s32.totalorder %s48, %s62
    %p64 = scmp.eq.s32.totalorder %s17, 0
    %p65 = por %p63, %p64
    %s67 = sadd.s32 %s66, 1
    %p70 = scmp.eq.s32.totalorder %s11, 1
    %p71 = scmp.ne.s32.totalorder %s66, %s68
    %p72 = scmp.eq.s32.totalorder %s11, 0
    %p73 = por %p71, %p72
    %p74 = scmp.ne.s32.totalorder %s66, %s68
    %p75 = scmp.eq.s32.totalorder %s16, 1
    %p76 = por %p74, %p75
    %p77 = scmp.ne.s32.totalorder %s68, %s69
    %p78 = scmp.eq.s32.totalorder %s16, 0
    %p79 = por %p77, %p78
    %p80 = scmp.ne.s32.totalorder %s68, %s69
    %p81 = scmp.eq.s32.totalorder %s17, 1
    %p82 = por %p80, %p81
    %p84 = scmp.ne.s32.totalorder %s69, %s83
    %p85 = scmp.eq.s32.totalorder %s17, 0
    %p86 = por %p84, %p85
    %s88 = sadd.s32 %s87, 1
    %p91 = scmp.eq.s32.totalorder %s11, 1
    %p92 = scmp.ne.s32.totalorder %s87, %s89
    %p93 = scmp.eq.s32.totalorder %s11, 0
    %p94 = por %p92, %p93
    %p95 = scmp.ne.s32.totalorder %s87, %s89
    %p96 = scmp.eq.s32.totalorder %s16, 1
    %p97 = por %p95, %p96
    %p98 = scmp.ne.s32.totalorder %s89, %s90
    %p99 = scmp.eq.s32.totalorder %s16, 0
    %p100 = por %p98, %p99
    %p101 = scmp.ne.s32.totalorder %s89, %s90
    %p102 = scmp.eq.s32.totalorder %s17, 1
    %p103 = por %p101, %p102
    %p105 = scmp.ne.s32.totalorder %s90, %s104
    %p106 = scmp.eq.s32.totalorder %s17, 0
    %p107 = por %p105, %p106
    %s109 = sadd.s32 %s108, 1
    %p112 = scmp.eq.s32.totalorder %s11, 1
    %p113 = scmp.ne.s32.totalorder %s108, %s110
    %p114 = scmp.eq.s32.totalorder %s11, 0
    %p115 = por %p113, %p114
    %p116 = scmp.ne.s32.totalorder %s108, %s110
    %p117 = scmp.eq.s32.totalorder %s16, 1
    %p118 = por %p116, %p117
    %p119 = scmp.ne.s32.totalorder %s110, %s111
    %p120 = scmp.eq.s32.totalorder %s16, 0
    %p121 = por %p119, %p120
    %p122 = scmp.ne.s32.totalorder %s110, %s111
    %p123 = scmp.eq.s32.totalorder %s17, 1
    %p124 = por %p122, %p123
    %p126 = scmp.ne.s32.totalorder %s111, %s125
    %p127 = scmp.eq.s32.totalorder %s17, 0
    %p128 = por %p126, %p127
    %s129 = ssub.s32 %s11, %s18
    %p130 = scmp.eq.s32.totalorder %s129, 0
    %s132 = sadd.s32 %s131, 1
    %s133 = scalar_select %p130, %s131, %s132
    %p136 = pneg %p130
    %p137 = scmp.eq.s32.totalorder %s11, 1
    %p138 = por %p136, %p137
    %p139 = scmp.ne.s32.totalorder %s131, %s134
    %p140 = scmp.eq.s32.totalorder %s11, 0
    %p141 = por %p139, %p140
    %p142 = scmp.ne.s32.totalorder %s131, %s134
    %p143 = scmp.eq.s32.totalorder %s16, 1
    %p144 = por %p142, %p143
    %p145 = scmp.ne.s32.totalorder %s134, %s135
    %p146 = scmp.eq.s32.totalorder %s16, 0
    %p147 = por %p145, %p146
    %p148 = scmp.ne.s32.totalorder %s134, %s135
    %p149 = scmp.eq.s32.totalorder %s17, 1
    %p150 = por %p148, %p149
    %p152 = scmp.ne.s32.totalorder %s135, %s151
    %p153 = scmp.eq.s32.totalorder %s17, 0
    %p154 = por %p152, %p153
    %p155 = scmp.le.s32.totalorder 1, %s11
    %p156 = scmp.lt.s32.totalorder %s11, 3
    %p157 = pnand %p155, %p156
    %p158 = pneg %p157
    // Predicated region
    $region9: #{ffnn_forward.1} parent=5 // pred_check
      _
    $region10: #{ffnn_forward.1} parent=5 // pred_check_branch
      %160 = sbr.rel (%p157) target = $region12
    $region11: #{ffnn_forward.1} parent=5 // pred_region
      %s161 = ssub.s32 %s11, 1
      // Predicated region
      $region13: #{ffnn_forward.1} parent=11 // pred_check
        %p162 = pneg %p58
      $region14: #{ffnn_forward.1} parent=11 // pred_check_branch
        %164 = sbr.rel (%p162) target = $region16
      $region15: #{ffnn_forward.1} parent=11 // pred_region
        _
      $region16: #{ffnn_forward.1} parent=11 // pred_fallthru
        _
      // Predicated region
      $region17: #{ffnn_forward.1} parent=11 // pred_check
        %p165 = pneg %p79
      $region18: #{ffnn_forward.1} parent=11 // pred_check_branch
        %167 = sbr.rel (%p165) target = $region20
      $region19: #{ffnn_forward.1} parent=11 // pred_region
        _
      $region20: #{ffnn_forward.1} parent=11 // pred_fallthru
        _
      // Predicated region
      $region21: #{ffnn_forward.1} parent=11 // pred_check
        %p168 = pneg %p100
      $region22: #{ffnn_forward.1} parent=11 // pred_check_branch
        %170 = sbr.rel (%p168) target = $region24
      $region23: #{ffnn_forward.1} parent=11 // pred_region
        _
      $region24: #{ffnn_forward.1} parent=11 // pred_fallthru
        _
      // Predicated region
      $region25: #{ffnn_forward.1} parent=11 // pred_check
        %p171 = pneg %p121
      $region26: #{ffnn_forward.1} parent=11 // pred_check_branch
        %173 = sbr.rel (%p171) target = $region28
      $region27: #{ffnn_forward.1} parent=11 // pred_region
        _
      $region28: #{ffnn_forward.1} parent=11 // pred_fallthru
        _
    $region12: #{ffnn_forward.1} parent=5 // pred_fallthru
      _
    %p174 = scmp.lt.s32.totalorder %s11, 2
    // Predicated region
    $region29: #{ffnn_forward.1} parent=5 // pred_check
      %p175 = pneg %p174
    $region30: #{ffnn_forward.1} parent=5 // pred_check_branch
      %177 = sbr.rel (%p175) target = $region32
    $region31: #{ffnn_forward.1} parent=5 // pred_region
      // Predicated region
      $region33: #{ffnn_forward.1} parent=31 // pred_check
        %p178 = pneg %p31
      $region34: #{ffnn_forward.1} parent=31 // pred_check_branch
        %180 = sbr.rel (%p178) target = $region36
      $region35: #{ffnn_forward.1} parent=31 // pred_region
        %s181 = smul.u32 4, %s11
        %p182 = scmp.lt.s32.totalorder %s181, 7
        %s183 = scalar_select %p182, %s181, 7
        %s184 = smul.addr %s183, 4
        %s185 = scalar_lea.vmem %s0, %s184
        %s186 = smul.u32 4, %s11
      $region36: #{ffnn_forward.1} parent=31 // pred_fallthru
        _
    $region32: #{ffnn_forward.1} parent=5 // pred_fallthru
      _
    %p187 = scmp.le.s32.totalorder 1, %s11
    %p188 = scmp.lt.s32.totalorder %s11, 3
    %p189 = pnand %p187, %p188
    %p190 = pneg %p189
    // Predicated region
    $region37: #{ffnn_forward.1} parent=5 // pred_check
      _
    $region38: #{ffnn_forward.1} parent=5 // pred_check_branch
      %192 = sbr.rel (%p189) target = $region40
    $region39: #{ffnn_forward.1} parent=5 // pred_region
      %s193 = ssub.s32 %s11, 1
      %s194 = smul.u32 4, %s16
      %p195 = scmp.lt.s32.totalorder %s194, 7
      %s196 = scalar_select %p195, %s194, 7
      %s197 = smul.addr %s196, 4
      %s198 = scalar_lea.vmem %s0, %s197
      %p199 = pneg %p37
      %p200 = pneg %p34
      %p201 = pneg %p58
      %p202 = pneg %p55
      %p203 = pneg %p79
      %p204 = pneg %p76
      %p205 = pneg %p100
      %p206 = pneg %p97
      %p207 = pneg %p121
      %p208 = pneg %p118
      %p209 = pneg %p147
      %p210 = pneg %p144
      %s211 = smul.u32 4, %s16
      %p212 = scmp.lt.s32.totalorder %s211, 7
      %s213 = scalar_select %p212, %s211, 7
      %s214 = smul.addr %s213, 8
      %s215 = scalar_lea.vmem %s5, %s214
      %s216 = smul.u32 4, %s16
      %p217 = scmp.lt.s32.totalorder %s216, 7
      %s218 = scalar_select %p217, %s216, 7
      %s219 = smul.addr %s218, 4
      %s220 = scalar_lea.vmem %s0, %s219
      %s221 = smul.u32 4, %s16
      %s222 = smul.u32 4, %s16
      %p223 = scmp.lt.s32.totalorder %s222, 7
      %s224 = scalar_select %p223, %s222, 7
      %s225 = smul.addr %s224, 8
      %s226 = scalar_lea.vmem %s5, %s225
      %s227 = smul.u32 4, %s16
      %v229 = vld [vmem:[%s220] sm:$0xf]
      %v230 = vld [vmem:[%s220 + $0x4] sm:$0xf]
      %v231 = vld [vmem:[%s220 + $0x8] sm:$0xf]
      %v232 = vld [vmem:[%s220 + $0xc] sm:$0xf]
      %v233 = vld [vmem:[%s1] sm:$0xf]
      %v234 = vld [vmem:[%s1 + $0x4] sm:$0xf]
      %v235 = vld [vmem:[%s1 + $0x8] sm:$0xf]
      %v236 = vld [vmem:[%s1 + $0xc] sm:$0xf]
      %v237 = vld [vmem:[%s1 + $0x10] sm:$0xf]
      %v238 = vld [vmem:[%s1 + $0x14] sm:$0xf]
      %v239 = vld [vmem:[%s1 + $0x18] sm:$0xf]
      %v240 = vld [vmem:[%s1 + $0x1c] sm:$0xf]
      %v241 = vld [vmem:[%s1 + $0x20] sm:$0xf]
      %v242 = vld [vmem:[%s1 + $0x24] sm:$0xf]
      %v243 = vld [vmem:[%s1 + $0x28] sm:$0xf]
      %v244 = vld [vmem:[%s1 + $0x2c] sm:$0xf]
      %v245 = vld [vmem:[%s1 + $0x30] sm:$0xf]
      %v246 = vld [vmem:[%s1 + $0x34] sm:$0xf]
      %v247 = vld [vmem:[%s1 + $0x38] sm:$0xf]
      %v248 = vld [vmem:[%s1 + $0x3c] sm:$0xf]
      %v249 = vld [vmem:[%s2] sm:$0x1]
      %v251 = vlaneseq
      %v252 = vshrl.u32 %v251, 7
      %v253 = vsub.s32 0, %v252
      %v254 = vrot.slane %v249, %v253
      %v260 = vunpack.c.l.b16 %v229
      %v261 = vunpack.c.l.b16 %v230
      %v262 = vunpack.c.l.b16 %v231
      %v263 = vunpack.c.l.b16 %v232
      %v264 = vpack.c.b16 %v261, %v260
      %v265 = vpack.c.b16 %v263, %v262
      %v284 = vunpack.c.l.b16 %v233
      %v285 = vunpack.c.l.b16 %v234
      %v286 = vunpack.c.l.b16 %v235
      %v287 = vunpack.c.l.b16 %v236
      %v288 = vunpack.c.l.b16 %v237
      %v289 = vunpack.c.l.b16 %v238
      %v290 = vunpack.c.l.b16 %v239
      %v291 = vunpack.c.l.b16 %v240
      %v292 = vunpack.c.l.b16 %v241
      %v293 = vunpack.c.l.b16 %v242
      %v294 = vunpack.c.l.b16 %v243
      %v295 = vunpack.c.l.b16 %v244
      %v296 = vunpack.c.l.b16 %v245
      %v297 = vunpack.c.l.b16 %v246
      %v298 = vunpack.c.l.b16 %v247
      %v299 = vunpack.c.l.b16 %v248
      %v300 = vpack.c.b16 %v285, %v284
      %v301 = vpack.c.b16 %v287, %v286
      %v302 = vpack.c.b16 %v289, %v288
      %v303 = vpack.c.b16 %v291, %v290
      %v304 = vpack.c.b16 %v293, %v292
      %v305 = vpack.c.b16 %v295, %v294
      %v306 = vpack.c.b16 %v297, %v296
      %v307 = vpack.c.b16 %v299, %v298
      %316 = vmatprep.subr.bf16.mxu0 0
      %317 = vmatpush1.bf16.msra.mxu0 %v300
      %318 = vmatprep.subr.bf16.mxu0 0
      %319 = vmatpush1.bf16.msra.mxu0 %v301
      %320 = vmatprep.subr.bf16.mxu0 0
      %321 = vmatpush1.bf16.msra.mxu0 %v302
      %322 = vmatprep.subr.bf16.mxu0 0
      %323 = vmatpush1.bf16.msra.mxu0 %v303
      %324 = vmatprep.subr.bf16.mxu0 0
      %325 = vmatpush1.bf16.msra.mxu0 %v304
      %326 = vmatprep.subr.bf16.mxu0 0
      %327 = vmatpush1.bf16.msra.mxu0 %v305
      %328 = vmatprep.subr.bf16.mxu0 0
      %329 = vmatpush1.bf16.msra.mxu0 %v306
      %330 = vmatprep.subr.bf16.mxu0 0
      %331 = vmatpush1.bf16.msra.mxu0 %v307
      %332 = vmatprep.subr.bf16.mxu0 0
      %333 = vmatpush1.bf16.msra.mxu0 0
      %334 = vmatprep.subr.bf16.mxu0 0
      %335 = vmatpush1.bf16.msra.mxu0 0
      %336 = vmatprep.subr.bf16.mxu0 0
      %337 = vmatpush1.bf16.msra.mxu0 0
      %338 = vmatprep.subr.bf16.mxu0 0
      %339 = vmatpush1.bf16.msra.mxu0 0
      %340 = vmatprep.subr.bf16.mxu0 0
      %341 = vmatpush1.bf16.msra.mxu0 0
      %342 = vmatprep.subr.bf16.mxu0 0
      %343 = vmatpush1.bf16.msra.mxu0 0
      %344 = vmatprep.subr.bf16.mxu0 0
      %345 = vmatpush1.bf16.msra.mxu0 0
      %346 = vmatprep.subr.bf16.mxu0 0
      %347 = vmatpush1.bf16.msra.mxu0 0
      %348 = vmatprep.mubr.bf16.mxu0 0
      %349 = vmatmul.mubr.bf16.gmra.mrb[0].mxu0 %v264
      %v350 = vpop.f32.mrb[0].mxu0
      %v351 = vadd.f32 %v254, %v350
      %v352 = vpop.f32.mrb[0].mxu0
      %v353 = vpop.f32.mrb[0].mxu0
      %v354 = vadd.f32 %v254, %v353
      %v355 = vpop.f32.mrb[0].mxu0
      %356 = vmatprep.mubr.bf16.mxu0 0
      %357 = vmatmul.mubr.bf16.gmra.mrb[0].mxu0 %v265
      %v358 = vpop.f32.mrb[0].mxu0
      %v359 = vadd.f32 %v254, %v358
      %v360 = vpop.f32.mrb[0].mxu0
      %v361 = vpop.f32.mrb[0].mxu0
      %v362 = vadd.f32 %v254, %v361
      %v363 = vpop.f32.mrb[0].mxu0
      %364 = vdwg.mxu0
      %v365 = vtanh.pop %v351
      %v366 = vtanh.pop %v354
      %v367 = vtanh.pop %v359
      %v368 = vtanh.pop %v362
      %v369 = vpack.c.bf16 %v366, %v365
      %v370 = vpack.c.bf16 %v368, %v367
      %v371 = vld [vmem:[%s3] sm:$0xf]
      %v372 = vld [vmem:[%s3 + $0x4] sm:$0xf]
      %v373 = vld [vmem:[%s3 + $0x8] sm:$0xf]
      %v374 = vld [vmem:[%s3 + $0xc] sm:$0xf]
      %v375 = vld [vmem:[%s3 + $0x10] sm:$0xf]
      %v376 = vld [vmem:[%s3 + $0x14] sm:$0xf]
      %v377 = vld [vmem:[%s3 + $0x18] sm:$0xf]
      %v378 = vld [vmem:[%s3 + $0x1c] sm:$0xf]
      %v379 = vld [vmem:[%s3 + $0x20] sm:$0xf]
      %v380 = vld [vmem:[%s3 + $0x24] sm:$0xf]
      %v381 = vld [vmem:[%s3 + $0x28] sm:$0xf]
      %v382 = vld [vmem:[%s3 + $0x2c] sm:$0xf]
      %v383 = vld [vmem:[%s3 + $0x30] sm:$0xf]
      %v384 = vld [vmem:[%s3 + $0x34] sm:$0xf]
      %v385 = vld [vmem:[%s3 + $0x38] sm:$0xf]
      %v386 = vld [vmem:[%s3 + $0x3c] sm:$0xf]
      %v387 = vld [vmem:[%s4] sm:$0x1]
      %v389 = vlaneseq
      %v390 = vshrl.u32 %v389, 7
      %v391 = vsub.s32 0, %v390
      %v392 = vrot.slane %v387, %v391
      %v410 = vunpack.c.l.b16 %v371
      %v411 = vunpack.c.l.b16 %v372
      %v412 = vunpack.c.l.b16 %v373
      %v413 = vunpack.c.l.b16 %v374
      %v414 = vunpack.c.l.b16 %v375
      %v415 = vunpack.c.l.b16 %v376
      %v416 = vunpack.c.l.b16 %v377
      %v417 = vunpack.c.l.b16 %v378
      %v418 = vunpack.c.l.b16 %v379
      %v419 = vunpack.c.l.b16 %v380
      %v420 = vunpack.c.l.b16 %v381
      %v421 = vunpack.c.l.b16 %v382
      %v422 = vunpack.c.l.b16 %v383
      %v423 = vunpack.c.l.b16 %v384
      %v424 = vunpack.c.l.b16 %v385
      %v425 = vunpack.c.l.b16 %v386
      %v426 = vpack.c.b16 %v411, %v410
      %v427 = vpack.c.b16 %v413, %v412
      %v428 = vpack.c.b16 %v415, %v414
      %v429 = vpack.c.b16 %v417, %v416
      %v430 = vpack.c.b16 %v419, %v418
      %v431 = vpack.c.b16 %v421, %v420
      %v432 = vpack.c.b16 %v423, %v422
      %v433 = vpack.c.b16 %v425, %v424
      %442 = vmatprep.subr.bf16.mxu0 0
      %443 = vmatpush1.bf16.msra.mxu0 %v426
      %444 = vmatprep.subr.bf16.mxu0 0
      %445 = vmatpush1.bf16.msra.mxu0 %v427
      %446 = vmatprep.subr.bf16.mxu0 0
      %447 = vmatpush1.bf16.msra.mxu0 %v428
      %448 = vmatprep.subr.bf16.mxu0 0
      %449 = vmatpush1.bf16.msra.mxu0 %v429
      %450 = vmatprep.subr.bf16.mxu0 0
      %451 = vmatpush1.bf16.msra.mxu0 %v430
      %452 = vmatprep.subr.bf16.mxu0 0
      %453 = vmatpush1.bf16.msra.mxu0 %v431
      %454 = vmatprep.subr.bf16.mxu0 0
      %455 = vmatpush1.bf16.msra.mxu0 %v432
      %456 = vmatprep.subr.bf16.mxu0 0
      %457 = vmatpush1.bf16.msra.mxu0 %v433
      %458 = vmatprep.subr.bf16.mxu0 0
      %459 = vmatpush1.bf16.msra.mxu0 0
      %460 = vmatprep.subr.bf16.mxu0 0
      %461 = vmatpush1.bf16.msra.mxu0 0
      %462 = vmatprep.subr.bf16.mxu0 0
      %463 = vmatpush1.bf16.msra.mxu0 0
      %464 = vmatprep.subr.bf16.mxu0 0
      %465 = vmatpush1.bf16.msra.mxu0 0
      %466 = vmatprep.subr.bf16.mxu0 0
      %467 = vmatpush1.bf16.msra.mxu0 0
      %468 = vmatprep.subr.bf16.mxu0 0
      %469 = vmatpush1.bf16.msra.mxu0 0
      %470 = vmatprep.subr.bf16.mxu0 0
      %471 = vmatpush1.bf16.msra.mxu0 0
      %472 = vmatprep.subr.bf16.mxu0 0
      %473 = vmatpush1.bf16.msra.mxu0 0
      %474 = vmatprep.mubr.bf16.mxu0 0
      %475 = vmatmul.mubr.bf16.gmra.mrb[0].mxu0 %v369
      %v476 = vpop.f32.mrb[0].mxu0
      %v477 = vadd.f32 %v392, %v476
      %v478 = vpop.f32.mrb[0].mxu0
      %v479 = vpop.f32.mrb[0].mxu0
      %v480 = vadd.f32 %v392, %v479
      %v481 = vpop.f32.mrb[0].mxu0
      %482 = vmatprep.mubr.bf16.mxu0 0
      %483 = vmatmul.mubr.bf16.gmra.mrb[0].mxu0 %v370
      %v484 = vpop.f32.mrb[0].mxu0
      %v485 = vadd.f32 %v392, %v484
      %v486 = vpop.f32.mrb[0].mxu0
      %v487 = vpop.f32.mrb[0].mxu0
      %v488 = vadd.f32 %v392, %v487
      %v489 = vpop.f32.mrb[0].mxu0
      %490 = vdwg.mxu0
      %491 = vst [vmem:[%s226] sm:$0xff] %v477
      %492 = vst [vmem:[%s226 + $0x8] sm:$0xff] %v480
      %493 = vst [vmem:[%s226 + $0x10] sm:$0xff] %v485
      %494 = vst [vmem:[%s226 + $0x18] sm:$0xff] %v488
      %s495 = smul.u32 4, %s16
      %p496 = scmp.lt.s32.totalorder %s495, 7
      %s497 = scalar_select %p496, %s495, 7
      %s498 = smul.addr %s497, 8
      %s499 = scalar_lea.vmem %s5, %s498
      // Predicated region
      $region41: #{ffnn_forward.1} parent=39 // pred_check
        %p500 = pneg %p144
      $region42: #{ffnn_forward.1} parent=39 // pred_check_branch
        %502 = sbr.rel (%p500) target = $region44
      $region43: #{ffnn_forward.1} parent=39 // pred_region
        %s503 = smul.u32 4, %s16
      $region44: #{ffnn_forward.1} parent=39 // pred_fallthru
        _
    $region40: #{ffnn_forward.1} parent=5 // pred_fallthru
      _
    %p504 = scmp.le.s32.totalorder 2, %s11
    // Predicated region
    $region45: #{ffnn_forward.1} parent=5 // pred_check
      %p505 = pneg %p504
    $region46: #{ffnn_forward.1} parent=5 // pred_check_branch
      %507 = sbr.rel (%p505) target = $region48
    $region47: #{ffnn_forward.1} parent=5 // pred_region
      %s508 = ssub.s32 %s11, 2
      // Predicated region
      $region49: #{ffnn_forward.1} parent=47 // pred_check
        %p509 = pneg %p150
      $region50: #{ffnn_forward.1} parent=47 // pred_check_branch
        %511 = sbr.rel (%p509) target = $region52
      $region51: #{ffnn_forward.1} parent=47 // pred_region
        %s512 = smul.u32 4, %s17
        %p513 = scmp.lt.s32.totalorder %s512, 7
        %s514 = scalar_select %p513, %s512, 7
        %s515 = smul.addr %s514, 8
        %s516 = scalar_lea.vmem %s5, %s515
      $region52: #{ffnn_forward.1} parent=47 // pred_fallthru
        _
    $region48: #{ffnn_forward.1} parent=5 // pred_fallthru
      _
  $region6: #{ffnn_forward.1} parent=0 // loop_footer
    %s15 = sadd.s32 1, %s11
  $region7: #{ffnn_forward.1} parent=0 // loop_footer_branch
    %10 = sbr.rel target = $region3
  $region8: #{ffnn_forward.1} parent=0 // loop_exit
    _

</llo_original>
